<compile_context>
chip_gen: v7x
topology: tpu7x:2x2x1
jax: 0.10.0
libtpu: 0.0.40
codegen_flags: <defaults>
</compile_context>

<pallas_src>
from functools import partial

import numpy as np

import jax
import jax.numpy as jnp
from jax.experimental import pallas as pl
from jax.experimental.pallas import tpu as pltpu


# ---------------------------------------------------------------------------
# Fused kernel: slice1 (conv3x3+ReLU) -> slice2 (conv3x3+ReLU).
# One image row is a single (W*C,) vector living along the 128-wide lane axis;
# the whole (sub-)batch is stacked along sublanes as the matmul M dimension.
# ---------------------------------------------------------------------------
def _fused_two_slice_kernel(x_ref, w1_ref, b1_ref, w2_ref, b2_ref,
                            o1_ref, o2_ref, *, img_h):
    """x_ref : (M, W*Cin_p)  f32   lane-packed image rows, M = images * H
       w*_ref: (3, W*Cin, W*Cout)  bf16 banded kh-bands (top, mid, bottom)
       b*_ref: (1, W*Cout)   f32   bias tiled per output column
       o*_ref: (M, W*Cout)   f32   lane-dense outputs (last dims 128 / 256)
    """
    rows = x_ref[...]
    m = rows.shape[0]

    def conv3x3_relu(r, w_ref, b_ref):
        # Row index within its image: masks the SAME top/bottom padding rows
        # and stops the sublane roll from leaking rows across stacked images.
        rid = jax.lax.broadcasted_iota(jnp.int32, r.shape, 0) % img_h
        up = jnp.where(rid == 0, 0.0, pltpu.roll(r, shift=1, axis=0))
        dn = jnp.where(rid == img_h - 1, 0.0,
                       pltpu.roll(r, shift=m - 1, axis=0))
        # Three K=W*Cin matmuls accumulating in f32 (the MXU result path does
        # the adds); operands cast to bf16 so the MXU runs at its native rate.
        acc = jnp.dot(up.astype(jnp.bfloat16), w_ref[0],
                      preferred_element_type=jnp.float32)
        acc += jnp.dot(r.astype(jnp.bfloat16), w_ref[1],
                       preferred_element_type=jnp.float32)
        acc += jnp.dot(dn.astype(jnp.bfloat16), w_ref[2],
                       preferred_element_type=jnp.float32)
        return jnp.maximum(acc + b_ref[...], 0.0)

    h1 = conv3x3_relu(rows, w1_ref, b1_ref)
    o1_ref[...] = h1.astype(o1_ref.dtype)            # slice1 feature
    h2 = conv3x3_relu(h1, w2_ref, b2_ref)             # h1 never leaves VMEM
    o2_ref[...] = h2.astype(o2_ref.dtype)             # slice2 feature


@partial(jax.jit, static_argnames=("cin_pad", "batch_blocks"))
def fused_feature_extractor(x_nhwc, wb1, bt1, wb2, bt2, *,
                            cin_pad, batch_blocks=1):
    """Runs both slices in one pallas_call.  Returns (h1_nhwc, h2_nhwc)."""
    n, h, w, c = x_nhwc.shape
    c1 = bt1.shape[1] // w
    c2 = bt2.shape[1] // w
    if cin_pad > c:                       # lane-dense input: W*Cin_p % 128 == 0
        x_nhwc = jnp.pad(x_nhwc, ((0, 0), (0, 0), (0, 0), (0, cin_pad - c)))
    x_rows = x_nhwc.reshape(n * h, w * cin_pad)       # contiguous -> free

    assert n % batch_blocks == 0
    rows_per_block = (n // batch_blocks) * h
    kernel = partial(_fused_two_slice_kernel, img_h=h)

    o1, o2 = pl.pallas_call(
        kernel,
        out_shape=(jax.ShapeDtypeStruct((n * h, w * c1), jnp.float32),
                   jax.ShapeDtypeStruct((n * h, w * c2), jnp.float32)),
        grid_spec=pltpu.PrefetchScalarGridSpec(
            num_scalar_prefetch=0,
            grid=(batch_blocks,),                      # default: single step
            in_specs=[
                pl.BlockSpec((rows_per_block, w * cin_pad), lambda g: (g, 0)),
                pl.BlockSpec(wb1.shape, lambda g: (0, 0, 0)),   # resident
                pl.BlockSpec(bt1.shape, lambda g: (0, 0)),
                pl.BlockSpec(wb2.shape, lambda g: (0, 0, 0)),
                pl.BlockSpec(bt2.shape, lambda g: (0, 0)),
            ],
            out_specs=[
                pl.BlockSpec((rows_per_block, w * c1), lambda g: (g, 0)),
                pl.BlockSpec((rows_per_block, w * c2), lambda g: (g, 0)),
            ],
        ),
        # batch_blocks > 1: the two v7x TensorCores each take a slab of images;
        # batch_blocks == 1 (default): no per-step pipeline overhead on v5e/v6e.
        compiler_params=pltpu.CompilerParams(
            dimension_semantics=(
                ("parallel",) if batch_blocks > 1 else ("arbitrary",))),
    )(x_rows, wb1, bt1, wb2, bt2)

    # Lane-dense (N*H, W*C) -> NHWC: pure contiguous reshape, no transpose.
    return o1.reshape(n, h, w, c1), o2.reshape(n, h, w, c2)


# ---------------------------------------------------------------------------
# Host-side parameter preparation.
# ---------------------------------------------------------------------------
def build_banded_weights(w_hwio, width, cin_pad=None):
    """Fold the 3x3 im2col gather (incl. SAME W-padding) into the weights.

    Returns B of shape (3, width*cin_p, width*cout) -- one matrix per kernel
    row kh -- such that for the lane-packed row slabs up/mid/dn (rows h-1, h,
    h+1; zeros outside the image),
        (up @ B[0] + mid @ B[1] + dn @ B[2])[h, w*cout + co]
            == conv3x3_same(x)[h, w, co].
    Channel slots >= cin (lane padding) map to zero rows.  Stored bf16.
    """
    kh_n, kw_n, cin, cout = w_hwio.shape
    cin_p = cin if cin_pad is None else cin_pad
    w_np = np.asarray(w_hwio, dtype=np.float32)
    banded = np.zeros((kh_n, width * cin_p, width * cout), dtype=np.float32)
    for kh in range(kh_n):
        for kw in range(kw_n):
            for w in range(width):
                wp = w + kw - 1                 # input column read by this tap
                if 0 <= wp < width:             # out-of-range tap == zero pad
                    banded[kh, wp * cin_p:wp * cin_p + cin,
                           w * cout:(w + 1) * cout] = w_np[kh, kw]
    return jnp.asarray(banded, dtype=jnp.bfloat16)


def init_conv_params(key, cin, cout):
    """Deterministic synthetic Conv2d(3x3) params (PyTorch OIHW -> HWIO)."""
    k_w, k_b = jax.random.split(key)
    w_oihw = 0.1 * jax.random.normal(k_w, (cout, cin, 3, 3), dtype=jnp.float32)
    bias = 0.1 * jax.random.normal(k_b, (cout,), dtype=jnp.float32)
    w_hwio = jnp.transpose(w_oihw, (2, 3, 1, 0))
    return w_hwio, bias


class FeatureExtractor:
    """JAX/Pallas equivalent of the PyTorch FeatureExtractor.

    slicenets: list of (name, (w_hwio, bias)) -- each slice is Conv3x3(SAME) +
    ReLU with frozen params, applied sequentially; forward() records every
    slice output in a dict, exactly like the PyTorch module.  Inputs/outputs
    are NHWC (channels-last) so the kernel boundary needs no transposes.
    Both slices execute inside one fused Pallas call.
    """
    # TODO(synk): only Conv3x3(SAME)+ReLU slices are translated; arbitrary
    # nn.Sequential slice contents have no generic fused-Pallas equivalent.

    def __init__(self, slicenets, width):
        assert len(slicenets) == 2, "this instantiation fuses exactly 2 slices"
        self.names = [name for name, _ in slicenets]
        (w1, b1), (w2, b2) = (params for _, params in slicenets)
        # Lane-dense input: round the first slice's Cin up so W*Cin % 128 == 0
        # (zero channel columns in the input, zero rows in its banded weights).
        cin = w1.shape[2]
        cin_pad = cin
        while (width * cin_pad) % 128:
            cin_pad += 1
        self.cin_pad = cin_pad
        self.banded = (build_banded_weights(w1, width, cin_pad),
                       build_banded_weights(w2, width))
        self.bias_tiles = tuple(
            jnp.tile(b, (width,)).reshape(1, width * w.shape[-1])
            .astype(jnp.float32)                        # bias/accum stay f32
            for (w, b) in ((w1, b1), (w2, b2)))

    def forward(self, x_nhwc, batch_blocks=1):
        h1, h2 = fused_feature_extractor(
            x_nhwc, self.banded[0], self.bias_tiles[0],
            self.banded[1], self.bias_tiles[1],
            cin_pad=self.cin_pad, batch_blocks=batch_blocks)
        return {self.names[0]: h1, self.names[1]: h2}


def reference_conv3x3_relu(x_nhwc, w_hwio, bias):
    y = jax.lax.conv_general_dilated(
        x_nhwc, w_hwio, window_strides=(1, 1), padding="SAME",
        dimension_numbers=("NHWC", "HWIO", "NHWC"))
    return jnp.maximum(y + bias[None, None, None, :], 0.0)


if __name__ == "__main__":
    N, C, H, W = 2, 4, 16, 16
    C1, C2 = 8, 16

    key = jax.random.PRNGKey(0)
    k_x, k_p1, k_p2 = jax.random.split(key, 3)
    x = jax.random.normal(k_x, (N, H, W, C), dtype=jnp.float32)   # NHWC input

    w1_hwio, b1 = init_conv_params(k_p1, C, C1)
    w2_hwio, b2 = init_conv_params(k_p2, C1, C2)

    extractor = FeatureExtractor(
        [("slice1", (w1_hwio, b1)), ("slice2", (w2_hwio, b2))], width=W)
    outmap = extractor.forward(x)        # default grid=(1,) single-TC path
    jax.block_until_ready(outmap)

    # Sanity check against the XLA conv (pure-f32 JAX reference); bf16 MXU
    # operands with f32 accumulation land within a few 1e-3.
    h1_ref = reference_conv3x3_relu(x, w1_hwio, b1)
    h2_ref = reference_conv3x3_relu(h1_ref, w2_hwio, b2)
    assert outmap["slice1"].shape == (N, H, W, C1)
    assert outmap["slice2"].shape == (N, H, W, C2)
    assert jnp.allclose(outmap["slice1"], h1_ref, atol=5e-2)
    assert jnp.allclose(outmap["slice2"], h2_ref, atol=5e-2)

    print("KERNEL_OK")
</pallas_src>

<mosaic_0001>
module attributes {stable_mosaic.version = 11 : i64} {
  func.func @_fused_two_slice_kernel(%arg0: i32, %arg1: memref<32x128xf32, #tpu.memory_space<vmem>>, %arg2: memref<3x128x128xbf16, #tpu.memory_space<vmem>>, %arg3: memref<1x128xf32, #tpu.memory_space<vmem>>, %arg4: memref<3x128x256xbf16, #tpu.memory_space<vmem>>, %arg5: memref<1x256xf32, #tpu.memory_space<vmem>>, %arg6: memref<32x128xf32, #tpu.memory_space<vmem>>, %arg7: memref<32x256xf32, #tpu.memory_space<vmem>>) attributes {dimension_semantics = [#tpu.dimension_semantics<arbitrary>], iteration_bounds = array<i64: 1>, scalar_prefetch = 0 : i64, scratch_operands = 0 : i64, tpu.core_type = #tpu.core_type<tc>, window_params = [{transform_indices = @transform_0, window_bounds = array<i64: 32, 128>}, {pipeline_mode = #tpu.pipeline_mode<synchronous>, transform_indices = @transform_1, window_bounds = array<i64: 3, 128, 128>}, {pipeline_mode = #tpu.pipeline_mode<synchronous>, transform_indices = @transform_2, window_bounds = array<i64: 1, 128>}, {pipeline_mode = #tpu.pipeline_mode<synchronous>, transform_indices = @transform_3, window_bounds = array<i64: 3, 128, 256>}, {pipeline_mode = #tpu.pipeline_mode<synchronous>, transform_indices = @transform_4, window_bounds = array<i64: 1, 256>}, {transform_indices = @transform_5, window_bounds = array<i64: 32, 128>}, {transform_indices = @transform_6, window_bounds = array<i64: 32, 256>}]} {
    %c0 = arith.constant 0 : index
    %c0_0 = arith.constant 0 : index
    %0 = vector.load %arg1[%c0, %c0_0] : memref<32x128xf32, #tpu.memory_space<vmem>>, vector<32x128xf32>
    %1 = tpu.iota {dimensions = array<i32: 0>} : vector<32x128xi32>
    %c16_i32 = arith.constant 16 : i32
    %c0_i32 = arith.constant 0 : i32
    %2 = arith.cmpi eq, %c16_i32, %c0_i32 : i32
    %c1_i32 = arith.constant 1 : i32
    %3 = arith.select %2, %c1_i32, %c16_i32 : i32
    %4 = vector.broadcast %3 : i32 to vector<32x128xi32>
    %5 = arith.remsi %1, %4 : vector<32x128xi32>
    %c0_i32_1 = arith.constant 0 : i32
    %6 = vector.broadcast %c0_i32_1 : i32 to vector<32x128xi32>
    %7 = arith.cmpi ne, %5, %6 : vector<32x128xi32>
    %c0_i32_2 = arith.constant 0 : i32
    %8 = vector.broadcast %c0_i32_2 : i32 to vector<32x128xi32>
    %9 = arith.cmpi slt, %5, %8 : vector<32x128xi32>
    %c0_i32_3 = arith.constant 0 : i32
    %10 = arith.cmpi slt, %3, %c0_i32_3 : i32
    %11 = vector.broadcast %10 : i1 to vector<32x128xi1>
    %12 = vector.broadcast %11 : vector<32x128xi1> to vector<32x128xi1>
    %13 = arith.xori %9, %12 : vector<32x128xi1>
    %14 = arith.andi %13, %7 : vector<32x128xi1>
    %15 = vector.broadcast %3 : i32 to vector<32x128xi32>
    %16 = arith.addi %5, %15 : vector<32x128xi32>
    %17 = arith.select %14, %16, %5 : vector<32x128xi1>, vector<32x128xi32>
    %c0_i32_4 = arith.constant 0 : i32
    %18 = vector.broadcast %c0_i32_4 : i32 to vector<32x128xi32>
    %19 = arith.cmpi eq, %17, %18 : vector<32x128xi32>
    %c1_i32_5 = arith.constant 1 : i32
    %20 = tpu.dynamic_rotate %0 by %c1_i32_5 dim 0 : vector<32x128xf32>, i32 -> vector<32x128xf32>
    %cst = arith.constant 0.000000e+00 : f32
    %21 = vector.broadcast %cst : f32 to vector<32x128xf32>
    %22 = arith.select %19, %21, %20 : vector<32x128xi1>, vector<32x128xf32>
    %c15_i32 = arith.constant 15 : i32
    %23 = vector.broadcast %c15_i32 : i32 to vector<32x128xi32>
    %24 = arith.cmpi eq, %17, %23 : vector<32x128xi32>
    %c31_i32 = arith.constant 31 : i32
    %25 = tpu.dynamic_rotate %0 by %c31_i32 dim 0 : vector<32x128xf32>, i32 -> vector<32x128xf32>
    %cst_6 = arith.constant 0.000000e+00 : f32
    %26 = vector.broadcast %cst_6 : f32 to vector<32x128xf32>
    %27 = arith.select %24, %26, %25 : vector<32x128xi1>, vector<32x128xf32>
    %28 = arith.truncf %22 : vector<32x128xf32> to vector<32x128xbf16>
    %c0_7 = arith.constant 0 : index
    %c0_8 = arith.constant 0 : index
    %c0_9 = arith.constant 0 : index
    %29 = vector.load %arg2[%c0_7, %c0_8, %c0_9] : memref<3x128x128xbf16, #tpu.memory_space<vmem>>, vector<1x128x128xbf16>
    %30 = vector.shape_cast %29 : vector<1x128x128xbf16> to vector<128x128xbf16>
    %cst_10 = arith.constant dense<0.000000e+00> : vector<32x128xf32>
    %31 = tpu.matmul %28, %30, %cst_10 {dimension_numbers = #tpu.dot_dimension_numbers<[1], [0], [0], [1], [0, 0, 1, 1], [], []>} : vector<32x128xbf16>, vector<128x128xbf16>, vector<32x128xf32> -> vector<32x128xf32>
    %32 = arith.truncf %0 : vector<32x128xf32> to vector<32x128xbf16>
    %c1 = arith.constant 1 : index
    %c0_11 = arith.constant 0 : index
    %c0_12 = arith.constant 0 : index
    %33 = vector.load %arg2[%c1, %c0_11, %c0_12] : memref<3x128x128xbf16, #tpu.memory_space<vmem>>, vector<1x128x128xbf16>
    %34 = vector.shape_cast %33 : vector<1x128x128xbf16> to vector<128x128xbf16>
    %cst_13 = arith.constant dense<0.000000e+00> : vector<32x128xf32>
    %35 = tpu.matmul %32, %34, %cst_13 {dimension_numbers = #tpu.dot_dimension_numbers<[1], [0], [0], [1], [0, 0, 1, 1], [], []>} : vector<32x128xbf16>, vector<128x128xbf16>, vector<32x128xf32> -> vector<32x128xf32>
    %36 = arith.addf %31, %35 : vector<32x128xf32>
    %37 = arith.truncf %27 : vector<32x128xf32> to vector<32x128xbf16>
    %c2 = arith.constant 2 : index
    %c0_14 = arith.constant 0 : index
    %c0_15 = arith.constant 0 : index
    %38 = vector.load %arg2[%c2, %c0_14, %c0_15] : memref<3x128x128xbf16, #tpu.memory_space<vmem>>, vector<1x128x128xbf16>
    %39 = vector.shape_cast %38 : vector<1x128x128xbf16> to vector<128x128xbf16>
    %cst_16 = arith.constant dense<0.000000e+00> : vector<32x128xf32>
    %40 = tpu.matmul %37, %39, %cst_16 {dimension_numbers = #tpu.dot_dimension_numbers<[1], [0], [0], [1], [0, 0, 1, 1], [], []>} : vector<32x128xbf16>, vector<128x128xbf16>, vector<32x128xf32> -> vector<32x128xf32>
    %41 = arith.addf %36, %40 : vector<32x128xf32>
    %c0_17 = arith.constant 0 : index
    %c0_18 = arith.constant 0 : index
    %42 = vector.load %arg3[%c0_17, %c0_18] : memref<1x128xf32, #tpu.memory_space<vmem>>, vector<1x128xf32>
    %43 = vector.broadcast %42 : vector<1x128xf32> to vector<32x128xf32>
    %44 = arith.addf %41, %43 : vector<32x128xf32>
    %cst_19 = arith.constant 0.000000e+00 : f32
    %45 = vector.broadcast %cst_19 : f32 to vector<32x128xf32>
    %46 = arith.maximumf %44, %45 : vector<32x128xf32>
    %c0_20 = arith.constant 0 : index
    %c0_21 = arith.constant 0 : index
    %47 = vector.load %arg6[%c0_20, %c0_21] : memref<32x128xf32, #tpu.memory_space<vmem>>, vector<32x128xf32>
    tpu.vector_store %arg6[%c0_20, %c0_21], %46 {strides = array<i32>} : memref<32x128xf32, #tpu.memory_space<vmem>>, vector<32x128xf32>,
    %48 = tpu.iota {dimensions = array<i32: 0>} : vector<32x128xi32>
    %c16_i32_22 = arith.constant 16 : i32
    %c0_i32_23 = arith.constant 0 : i32
    %49 = arith.cmpi eq, %c16_i32_22, %c0_i32_23 : i32
    %c1_i32_24 = arith.constant 1 : i32
    %50 = arith.select %49, %c1_i32_24, %c16_i32_22 : i32
    %51 = vector.broadcast %50 : i32 to vector<32x128xi32>
    %52 = arith.remsi %48, %51 : vector<32x128xi32>
    %c0_i32_25 = arith.constant 0 : i32
    %53 = vector.broadcast %c0_i32_25 : i32 to vector<32x128xi32>
    %54 = arith.cmpi ne, %52, %53 : vector<32x128xi32>
    %c0_i32_26 = arith.constant 0 : i32
    %55 = vector.broadcast %c0_i32_26 : i32 to vector<32x128xi32>
    %56 = arith.cmpi slt, %52, %55 : vector<32x128xi32>
    %c0_i32_27 = arith.constant 0 : i32
    %57 = arith.cmpi slt, %50, %c0_i32_27 : i32
    %58 = vector.broadcast %57 : i1 to vector<32x128xi1>
    %59 = vector.broadcast %58 : vector<32x128xi1> to vector<32x128xi1>
    %60 = arith.xori %56, %59 : vector<32x128xi1>
    %61 = arith.andi %60, %54 : vector<32x128xi1>
    %62 = vector.broadcast %50 : i32 to vector<32x128xi32>
    %63 = arith.addi %52, %62 : vector<32x128xi32>
    %64 = arith.select %61, %63, %52 : vector<32x128xi1>, vector<32x128xi32>
    %c0_i32_28 = arith.constant 0 : i32
    %65 = vector.broadcast %c0_i32_28 : i32 to vector<32x128xi32>
    %66 = arith.cmpi eq, %64, %65 : vector<32x128xi32>
    %c1_i32_29 = arith.constant 1 : i32
    %67 = tpu.dynamic_rotate %46 by %c1_i32_29 dim 0 : vector<32x128xf32>, i32 -> vector<32x128xf32>
    %cst_30 = arith.constant 0.000000e+00 : f32
    %68 = vector.broadcast %cst_30 : f32 to vector<32x128xf32>
    %69 = arith.select %66, %68, %67 : vector<32x128xi1>, vector<32x128xf32>
    %c15_i32_31 = arith.constant 15 : i32
    %70 = vector.broadcast %c15_i32_31 : i32 to vector<32x128xi32>
    %71 = arith.cmpi eq, %64, %70 : vector<32x128xi32>
    %c31_i32_32 = arith.constant 31 : i32
    %72 = tpu.dynamic_rotate %46 by %c31_i32_32 dim 0 : vector<32x128xf32>, i32 -> vector<32x128xf32>
    %cst_33 = arith.constant 0.000000e+00 : f32
    %73 = vector.broadcast %cst_33 : f32 to vector<32x128xf32>
    %74 = arith.select %71, %73, %72 : vector<32x128xi1>, vector<32x128xf32>
    %75 = arith.truncf %69 : vector<32x128xf32> to vector<32x128xbf16>
    %c0_34 = arith.constant 0 : index
    %c0_35 = arith.constant 0 : index
    %c0_36 = arith.constant 0 : index
    %76 = vector.load %arg4[%c0_34, %c0_35, %c0_36] : memref<3x128x256xbf16, #tpu.memory_space<vmem>>, vector<1x128x256xbf16>
    %77 = vector.shape_cast %76 : vector<1x128x256xbf16> to vector<128x256xbf16>
    %cst_37 = arith.constant dense<0.000000e+00> : vector<32x256xf32>
    %78 = tpu.matmul %75, %77, %cst_37 {dimension_numbers = #tpu.dot_dimension_numbers<[1], [0], [0], [1], [0, 0, 1, 1], [], []>} : vector<32x128xbf16>, vector<128x256xbf16>, vector<32x256xf32> -> vector<32x256xf32>
    %79 = arith.truncf %46 : vector<32x128xf32> to vector<32x128xbf16>
    %c1_38 = arith.constant 1 : index
    %c0_39 = arith.constant 0 : index
    %c0_40 = arith.constant 0 : index
    %80 = vector.load %arg4[%c1_38, %c0_39, %c0_40] : memref<3x128x256xbf16, #tpu.memory_space<vmem>>, vector<1x128x256xbf16>
    %81 = vector.shape_cast %80 : vector<1x128x256xbf16> to vector<128x256xbf16>
    %cst_41 = arith.constant dense<0.000000e+00> : vector<32x256xf32>
    %82 = tpu.matmul %79, %81, %cst_41 {dimension_numbers = #tpu.dot_dimension_numbers<[1], [0], [0], [1], [0, 0, 1, 1], [], []>} : vector<32x128xbf16>, vector<128x256xbf16>, vector<32x256xf32> -> vector<32x256xf32>
    %83 = arith.addf %78, %82 : vector<32x256xf32>
    %84 = arith.truncf %74 : vector<32x128xf32> to vector<32x128xbf16>
    %c2_42 = arith.constant 2 : index
    %c0_43 = arith.constant 0 : index
    %c0_44 = arith.constant 0 : index
    %85 = vector.load %arg4[%c2_42, %c0_43, %c0_44] : memref<3x128x256xbf16, #tpu.memory_space<vmem>>, vector<1x128x256xbf16>
    %86 = vector.shape_cast %85 : vector<1x128x256xbf16> to vector<128x256xbf16>
    %cst_45 = arith.constant dense<0.000000e+00> : vector<32x256xf32>
    %87 = tpu.matmul %84, %86, %cst_45 {dimension_numbers = #tpu.dot_dimension_numbers<[1], [0], [0], [1], [0, 0, 1, 1], [], []>} : vector<32x128xbf16>, vector<128x256xbf16>, vector<32x256xf32> -> vector<32x256xf32>
    %88 = arith.addf %83, %87 : vector<32x256xf32>
    %c0_46 = arith.constant 0 : index
    %c0_47 = arith.constant 0 : index
    %89 = vector.load %arg5[%c0_46, %c0_47] : memref<1x256xf32, #tpu.memory_space<vmem>>, vector<1x256xf32>
    %90 = vector.broadcast %89 : vector<1x256xf32> to vector<32x256xf32>
    %91 = arith.addf %88, %90 : vector<32x256xf32>
    %cst_48 = arith.constant 0.000000e+00 : f32
    %92 = vector.broadcast %cst_48 : f32 to vector<32x256xf32>
    %93 = arith.maximumf %91, %92 : vector<32x256xf32>
    %c0_49 = arith.constant 0 : index
    %c0_50 = arith.constant 0 : index
    %94 = vector.load %arg7[%c0_49, %c0_50] : memref<32x256xf32, #tpu.memory_space<vmem>>, vector<32x256xf32>
    tpu.vector_store %arg7[%c0_49, %c0_50], %93 {strides = array<i32>} : memref<32x256xf32, #tpu.memory_space<vmem>>, vector<32x256xf32>,
    return
  }
  func.func @transform_0(%arg0: i32) -> (i32, i32) {
    %c0_i32 = arith.constant 0 : i32
    %c0_i32_0 = arith.constant 0 : i32
    return %arg0, %c0_i32 : i32, i32
  }
  func.func @transform_1(%arg0: i32) -> (i32, i32, i32) {
    %c0_i32 = arith.constant 0 : i32
    %c0_i32_0 = arith.constant 0 : i32
    %c0_i32_1 = arith.constant 0 : i32
    %c0_i32_2 = arith.constant 0 : i32
    return %c0_i32, %c0_i32_0, %c0_i32_1 : i32, i32, i32
  }
  func.func @transform_2(%arg0: i32) -> (i32, i32) {
    %c0_i32 = arith.constant 0 : i32
    %c0_i32_0 = arith.constant 0 : i32
    %c0_i32_1 = arith.constant 0 : i32
    return %c0_i32, %c0_i32_0 : i32, i32
  }
  func.func @transform_3(%arg0: i32) -> (i32, i32, i32) {
    %c0_i32 = arith.constant 0 : i32
    %c0_i32_0 = arith.constant 0 : i32
    %c0_i32_1 = arith.constant 0 : i32
    %c0_i32_2 = arith.constant 0 : i32
    return %c0_i32, %c0_i32_0, %c0_i32_1 : i32, i32, i32
  }
  func.func @transform_4(%arg0: i32) -> (i32, i32) {
    %c0_i32 = arith.constant 0 : i32
    %c0_i32_0 = arith.constant 0 : i32
    %c0_i32_1 = arith.constant 0 : i32
    return %c0_i32, %c0_i32_0 : i32, i32
  }
  func.func @transform_5(%arg0: i32) -> (i32, i32) {
    %c0_i32 = arith.constant 0 : i32
    %c0_i32_0 = arith.constant 0 : i32
    return %arg0, %c0_i32 : i32, i32
  }
  func.func @transform_6(%arg0: i32) -> (i32, i32) {
    %c0_i32 = arith.constant 0 : i32
    %c0_i32_0 = arith.constant 0 : i32
    return %arg0, %c0_i32 : i32, i32
  }
}

</mosaic_0001>

<llo_original>
// kernel: fused_feature_extractor.1
$region0: #{fused_feature_extractor.1}
  #allocation0 [shape = 'u32[]', space=smem, size = 0x4, offset = 0x4, fixed_abs, tag = 'smem constant byte address 0x4 - core index']
  #allocation1 [shape = 'u32[144,128]{1,0:T(1,128)}', space=vmem, size = 0x12000, scoped, tag = 'internal scratch']
  %s0 = inlined_call_operand.vmem [shape: f32[32,128], index: 0, kind: input, shape index: {}]
  %s1 = inlined_call_operand.vmem [shape: bf16[3,128,128], index: 1, kind: input, shape index: {}]
  %s2 = inlined_call_operand.vmem [shape: f32[1,128], index: 2, kind: input, shape index: {}]
  %s3 = inlined_call_operand.vmem [shape: bf16[3,128,256], index: 3, kind: input, shape index: {}]
  %s4 = inlined_call_operand.vmem [shape: f32[1,256], index: 4, kind: input, shape index: {}]
  %s5 = inlined_call_operand.vmem [shape: f32[32,128], index: 5, kind: output, shape index: {0}]
  %s6 = inlined_call_operand.vmem [shape: f32[32,256], index: 6, kind: output, shape index: {1}]
  %7 = xla_tuple %s5, %s6
  %s8 = sld [smem:[#allocation0]]
  $region38: #{fused_feature_extractor.1} parent=0
    _
  %s10 = ssub.s32 1, %s8
  %s11 = scalar_select 0, %s10, %s8
  // Predicated region
  $region2: #{fused_feature_extractor.1} parent=0 // pred_check
    _
  $region3: #{fused_feature_extractor.1} parent=0 // pred_check_branch
    %13 = sbr.rel (0) target = $region5
  $region4: #{fused_feature_extractor.1} parent=0 // pred_region
    _
  $region5: #{fused_feature_extractor.1} parent=0 // pred_fallthru
    _
  // Predicated region
  $region6: #{fused_feature_extractor.1} parent=0 // pred_check
    _
  $region7: #{fused_feature_extractor.1} parent=0 // pred_check_branch
    %15 = sbr.rel (0) target = $region9
  $region8: #{fused_feature_extractor.1} parent=0 // pred_region
    _
  $region9: #{fused_feature_extractor.1} parent=0 // pred_fallthru
    _
  // Predicated region
  $region10: #{fused_feature_extractor.1} parent=0 // pred_check
    _
  $region11: #{fused_feature_extractor.1} parent=0 // pred_check_branch
    %17 = sbr.rel (0) target = $region13
  $region12: #{fused_feature_extractor.1} parent=0 // pred_region
    _
  $region13: #{fused_feature_extractor.1} parent=0 // pred_fallthru
    _
  // Predicated region
  $region14: #{fused_feature_extractor.1} parent=0 // pred_check
    _
  $region15: #{fused_feature_extractor.1} parent=0 // pred_check_branch
    %19 = sbr.rel (0) target = $region17
  $region16: #{fused_feature_extractor.1} parent=0 // pred_region
    _
  $region17: #{fused_feature_extractor.1} parent=0 // pred_fallthru
    _
  // Predicated region
  $region18: #{fused_feature_extractor.1} parent=0 // pred_check
    _
  $region19: #{fused_feature_extractor.1} parent=0 // pred_check_branch
    %21 = sbr.rel (0) target = $region21
  $region20: #{fused_feature_extractor.1} parent=0 // pred_region
    _
  $region21: #{fused_feature_extractor.1} parent=0 // pred_fallthru
    _
  %v23 = vld [vmem:[%s0] sm:$0xff]
  %v24 = vld [vmem:[%s0 + $0x8] sm:$0xff]
  %v25 = vld [vmem:[%s0 + $0x10] sm:$0xff]
  %v26 = vld [vmem:[%s0 + $0x18] sm:$0xff]
  %v27 = vlaneseq
  %v28 = vshrl.u32 %v27, 7
  %v29 = vadd.s32 %v28, 8
  %v30 = vadd.s32 %v28, 16
  %v31 = vadd.s32 %v28, 24
  %vm32 = vcmp.lt.s32.totalorder %v28, 0
  %v33 = vsub.s32 0, %v28
  %v34 = vsel %vm32, %v33, %v28
  %v35 = vshrl.u32 %v34, 4
  %v36 = vand.u32 %v34, 15
  %v37 = vsub.s32 0, %v36
  %v38 = vsel %vm32, %v37, %v36
  %vm39 = vcmp.lt.s32.totalorder %v29, 0
  %v40 = vsub.s32 0, %v29
  %v41 = vsel %vm39, %v40, %v29
  %v42 = vshrl.u32 %v41, 4
  %v43 = vand.u32 %v41, 15
  %v44 = vsub.s32 0, %v43
  %v45 = vsel %vm39, %v44, %v43
  %vm46 = vcmp.lt.s32.totalorder %v30, 0
  %v47 = vsub.s32 0, %v30
  %v48 = vsel %vm46, %v47, %v30
  %v49 = vshrl.u32 %v48, 4
  %v50 = vand.u32 %v48, 15
  %v51 = vsub.s32 0, %v50
  %v52 = vsel %vm46, %v51, %v50
  %vm53 = vcmp.lt.s32.totalorder %v31, 0
  %v54 = vsub.s32 0, %v31
  %v55 = vsel %vm53, %v54, %v31
  %v56 = vshrl.u32 %v55, 4
  %v57 = vand.u32 %v55, 15
  %v58 = vsub.s32 0, %v57
  %v59 = vsel %vm53, %v58, %v57
  %vm60 = vcmp.ne.s32.totalorder %v38, 0
  %vm61 = vcmp.ne.s32.totalorder %v45, 0
  %vm62 = vcmp.ne.s32.totalorder %v52, 0
  %vm63 = vcmp.ne.s32.totalorder %v59, 0
  %vm64 = vcmp.lt.s32.totalorder %v38, 0
  %vm65 = vcmp.lt.s32.totalorder %v45, 0
  %vm66 = vcmp.lt.s32.totalorder %v52, 0
  %vm67 = vcmp.lt.s32.totalorder %v59, 0
  %vm68 = vmand %vm64, %vm60
  %vm69 = vmand %vm65, %vm61
  %vm70 = vmand %vm66, %vm62
  %vm71 = vmand %vm67, %vm63
  %v72 = vadd.s32 %v38, 16
  %v73 = vadd.s32 %v45, 16
  %v74 = vadd.s32 %v52, 16
  %v75 = vadd.s32 %v59, 16
  %v76 = vsel %vm68, %v72, %v38
  %v77 = vsel %vm69, %v73, %v45
  %v78 = vsel %vm70, %v74, %v52
  %v79 = vsel %vm71, %v75, %v59
  %vm80 = vcmp.eq.s32.totalorder %v76, 0
  %vm81 = vcmp.eq.s32.totalorder %v77, 0
  %vm82 = vcmp.eq.s32.totalorder %v78, 0
  %vm83 = vcmp.eq.s32.totalorder %v79, 0
  %v84 = vrot.slane %v23, 7
  %v85 = vrot.slane %v24, 7
  %v86 = vrot.slane %v25, 7
  %v87 = vrot.slane %v26, 7
  %vm88 = vcmp.lt.s32.totalorder %v28, 1
  %v89 = vsel %vm88, %v86, %v87
  %v90 = vsel %vm88, %v85, %v86
  %v91 = vsel %vm88, %v84, %v85
  %v92 = vsel %vm88, %v87, %v84
  %v93 = vsel %vm80, 0.0, %v92
  %v94 = vsel %vm81, 0.0, %v91
  %v95 = vsel %vm82, 0.0, %v90
  %v96 = vsel %vm83, 0.0, %v89
  %vm97 = vcmp.eq.s32.totalorder %v76, 15
  %vm98 = vcmp.eq.s32.totalorder %v77, 15
  %vm99 = vcmp.eq.s32.totalorder %v78, 15
  %vm100 = vcmp.eq.s32.totalorder %v79, 15
  %v101 = vrot.slane %v23, 1
  %v102 = vrot.slane %v24, 1
  %v103 = vrot.slane %v25, 1
  %v104 = vrot.slane %v26, 1
  %vm105 = vcmp.lt.s32.totalorder %v28, 7
  %v106 = vsel %vm105, %v103, %v104
  %v107 = vsel %vm105, %v102, %v103
  %v108 = vsel %vm105, %v101, %v102
  %v109 = vsel %vm105, %v104, %v101
  %v110 = vsel %vm97, 0.0, %v108
  %v111 = vsel %vm98, 0.0, %v107
  %v112 = vsel %vm99, 0.0, %v106
  %v113 = vsel %vm100, 0.0, %v109
  %v114 = vpack.c.bf16 %v94, %v93
  %v115 = vpack.c.bf16 %v96, %v95
  %v116 = vld [vmem:[%s1] sm:$0xf]
  %v117 = vld [vmem:[%s1 + $0x4] sm:$0xf]
  %v118 = vld [vmem:[%s1 + $0x8] sm:$0xf]
  %v119 = vld [vmem:[%s1 + $0xc] sm:$0xf]
  %v120 = vld [vmem:[%s1 + $0x10] sm:$0xf]
  %v121 = vld [vmem:[%s1 + $0x14] sm:$0xf]
  %v122 = vld [vmem:[%s1 + $0x18] sm:$0xf]
  %v123 = vld [vmem:[%s1 + $0x1c] sm:$0xf]
  %v124 = vld [vmem:[%s1 + $0x20] sm:$0xf]
  %v125 = vld [vmem:[%s1 + $0x24] sm:$0xf]
  %v126 = vld [vmem:[%s1 + $0x28] sm:$0xf]
  %v127 = vld [vmem:[%s1 + $0x2c] sm:$0xf]
  %v128 = vld [vmem:[%s1 + $0x30] sm:$0xf]
  %v129 = vld [vmem:[%s1 + $0x34] sm:$0xf]
  %v130 = vld [vmem:[%s1 + $0x38] sm:$0xf]
  %v131 = vld [vmem:[%s1 + $0x3c] sm:$0xf]
  %v132 = vpack.c.bf16 %v24, %v23
  %v133 = vpack.c.bf16 %v26, %v25
  %s134 = scalar_lea.vmem %s1, 64
  %v135 = vld [vmem:[%s134] sm:$0xf]
  %v136 = vld [vmem:[%s134 + $0x4] sm:$0xf]
  %v137 = vld [vmem:[%s134 + $0x8] sm:$0xf]
  %v138 = vld [vmem:[%s134 + $0xc] sm:$0xf]
  %v139 = vld [vmem:[%s134 + $0x10] sm:$0xf]
  %v140 = vld [vmem:[%s134 + $0x14] sm:$0xf]
  %v141 = vld [vmem:[%s134 + $0x18] sm:$0xf]
  %v142 = vld [vmem:[%s134 + $0x1c] sm:$0xf]
  %v143 = vld [vmem:[%s134 + $0x20] sm:$0xf]
  %v144 = vld [vmem:[%s134 + $0x24] sm:$0xf]
  %v145 = vld [vmem:[%s134 + $0x28] sm:$0xf]
  %v146 = vld [vmem:[%s134 + $0x2c] sm:$0xf]
  %v147 = vld [vmem:[%s134 + $0x30] sm:$0xf]
  %v148 = vld [vmem:[%s134 + $0x34] sm:$0xf]
  %v149 = vld [vmem:[%s134 + $0x38] sm:$0xf]
  %v150 = vld [vmem:[%s134 + $0x3c] sm:$0xf]
  %v167 = vunpack.c.l.b16 %v135
  %v168 = vunpack.c.l.b16 %v136
  %v169 = vunpack.c.l.b16 %v137
  %v170 = vunpack.c.l.b16 %v138
  %v171 = vunpack.c.l.b16 %v139
  %v172 = vunpack.c.l.b16 %v140
  %v173 = vunpack.c.l.b16 %v141
  %v174 = vunpack.c.l.b16 %v142
  %v175 = vunpack.c.l.b16 %v143
  %v176 = vunpack.c.l.b16 %v144
  %v177 = vunpack.c.l.b16 %v145
  %v178 = vunpack.c.l.b16 %v146
  %v179 = vunpack.c.l.b16 %v147
  %v180 = vunpack.c.l.b16 %v148
  %v181 = vunpack.c.l.b16 %v149
  %v182 = vunpack.c.l.b16 %v150
  %v183 = vpack.c.b16 %v168, %v167
  %v184 = vpack.c.b16 %v170, %v169
  %v185 = vpack.c.b16 %v172, %v171
  %v186 = vpack.c.b16 %v174, %v173
  %v187 = vpack.c.b16 %v176, %v175
  %v188 = vpack.c.b16 %v178, %v177
  %v189 = vpack.c.b16 %v180, %v179
  %v190 = vpack.c.b16 %v182, %v181
  %199 = vmatprep.subr.bf16.mxu0 0
  %200 = vmatpush1.bf16.msra.mxu0 %v183
  %201 = vmatprep.subr.bf16.mxu0 0
  %202 = vmatpush1.bf16.msra.mxu0 %v184
  %203 = vmatprep.subr.bf16.mxu0 0
  %204 = vmatpush1.bf16.msra.mxu0 %v185
  %205 = vmatprep.subr.bf16.mxu0 0
  %206 = vmatpush1.bf16.msra.mxu0 %v186
  %207 = vmatprep.subr.bf16.mxu0 0
  %208 = vmatpush1.bf16.msra.mxu0 %v187
  %209 = vmatprep.subr.bf16.mxu0 0
  %210 = vmatpush1.bf16.msra.mxu0 %v188
  %211 = vmatprep.subr.bf16.mxu0 0
  %212 = vmatpush1.bf16.msra.mxu0 %v189
  %213 = vmatprep.subr.bf16.mxu0 0
  %214 = vmatpush1.bf16.msra.mxu0 %v190
  %215 = vmatprep.subr.bf16.mxu0 0
  %216 = vmatpush1.bf16.msra.mxu0 0
  %217 = vmatprep.subr.bf16.mxu0 0
  %218 = vmatpush1.bf16.msra.mxu0 0
  %219 = vmatprep.subr.bf16.mxu0 0
  %220 = vmatpush1.bf16.msra.mxu0 0
  %221 = vmatprep.subr.bf16.mxu0 0
  %222 = vmatpush1.bf16.msra.mxu0 0
  %223 = vmatprep.subr.bf16.mxu0 0
  %224 = vmatpush1.bf16.msra.mxu0 0
  %225 = vmatprep.subr.bf16.mxu0 0
  %226 = vmatpush1.bf16.msra.mxu0 0
  %227 = vmatprep.subr.bf16.mxu0 0
  %228 = vmatpush1.bf16.msra.mxu0 0
  %229 = vmatprep.subr.bf16.mxu0 0
  %230 = vmatpush1.bf16.msra.mxu0 0
  %231 = vmatprep.mubr.bf16.mxu0 0
  %232 = vmatmul.mubr.bf16.gmra.mrb[0].mxu0 %v132
  %v233 = vpop.f32.mrb[0].mxu0
  %v234 = vadd.f32 0.0, %v233
  %v235 = vpop.f32.mrb[0].mxu0
  %v236 = vpop.f32.mrb[0].mxu0
  %v237 = vadd.f32 0.0, %v236
  %v238 = vpop.f32.mrb[0].mxu0
  %239 = vmatprep.mubr.bf16.mxu0 0
  %240 = vmatmul.mubr.bf16.gmra.mrb[0].mxu0 %v133
  %v241 = vpop.f32.mrb[0].mxu0
  %v242 = vadd.f32 0.0, %v241
  %v243 = vpop.f32.mrb[0].mxu0
  %v244 = vpop.f32.mrb[0].mxu0
  %v245 = vadd.f32 0.0, %v244
  %v246 = vpop.f32.mrb[0].mxu0
  %247 = vdwg.mxu0
  %v264 = vunpack.c.l.b16 %v116
  %v265 = vunpack.c.l.b16 %v117
  %v266 = vunpack.c.l.b16 %v118
  %v267 = vunpack.c.l.b16 %v119
  %v268 = vunpack.c.l.b16 %v120
  %v269 = vunpack.c.l.b16 %v121
  %v270 = vunpack.c.l.b16 %v122
  %v271 = vunpack.c.l.b16 %v123
  %v272 = vunpack.c.l.b16 %v124
  %v273 = vunpack.c.l.b16 %v125
  %v274 = vunpack.c.l.b16 %v126
  %v275 = vunpack.c.l.b16 %v127
  %v276 = vunpack.c.l.b16 %v128
  %v277 = vunpack.c.l.b16 %v129
  %v278 = vunpack.c.l.b16 %v130
  %v279 = vunpack.c.l.b16 %v131
  %v280 = vpack.c.b16 %v265, %v264
  %v281 = vpack.c.b16 %v267, %v266
  %v282 = vpack.c.b16 %v269, %v268
  %v283 = vpack.c.b16 %v271, %v270
  %v284 = vpack.c.b16 %v273, %v272
  %v285 = vpack.c.b16 %v275, %v274
  %v286 = vpack.c.b16 %v277, %v276
  %v287 = vpack.c.b16 %v279, %v278
  %296 = vmatprep.subr.bf16.mxu0 0
  %297 = vmatpush1.bf16.msra.mxu0 %v280
  %298 = vmatprep.subr.bf16.mxu0 0
  %299 = vmatpush1.bf16.msra.mxu0 %v281
  %300 = vmatprep.subr.bf16.mxu0 0
  %301 = vmatpush1.bf16.msra.mxu0 %v282
  %302 = vmatprep.subr.bf16.mxu0 0
  %303 = vmatpush1.bf16.msra.mxu0 %v283
  %304 = vmatprep.subr.bf16.mxu0 0
  %305 = vmatpush1.bf16.msra.mxu0 %v284
  %306 = vmatprep.subr.bf16.mxu0 0
  %307 = vmatpush1.bf16.msra.mxu0 %v285
  %308 = vmatprep.subr.bf16.mxu0 0
  %309 = vmatpush1.bf16.msra.mxu0 %v286
  %310 = vmatprep.subr.bf16.mxu0 0
  %311 = vmatpush1.bf16.msra.mxu0 %v287
  %312 = vmatprep.subr.bf16.mxu0 0
  %313 = vmatpush1.bf16.msra.mxu0 0
  %314 = vmatprep.subr.bf16.mxu0 0
  %315 = vmatpush1.bf16.msra.mxu0 0
  %316 = vmatprep.subr.bf16.mxu0 0
  %317 = vmatpush1.bf16.msra.mxu0 0
  %318 = vmatprep.subr.bf16.mxu0 0
  %319 = vmatpush1.bf16.msra.mxu0 0
  %320 = vmatprep.subr.bf16.mxu0 0
  %321 = vmatpush1.bf16.msra.mxu0 0
  %322 = vmatprep.subr.bf16.mxu0 0
  %323 = vmatpush1.bf16.msra.mxu0 0
  %324 = vmatprep.subr.bf16.mxu0 0
  %325 = vmatpush1.bf16.msra.mxu0 0
  %326 = vmatprep.subr.bf16.mxu0 0
  %327 = vmatpush1.bf16.msra.mxu0 0
  %328 = vmatprep.mubr.bf16.mxu0 0
  %329 = vmatmul.mubr.bf16.gmra.mrb[0].mxu0 %v114
  %v330 = vpop.f32.mrb[0].mxu0
  %v331 = vadd.f32 %v234, %v330
  %v332 = vpop.f32.mrb[0].mxu0
  %v333 = vpop.f32.mrb[0].mxu0
  %v334 = vadd.f32 %v237, %v333
  %v335 = vpop.f32.mrb[0].mxu0
  %336 = vmatprep.mubr.bf16.mxu0 0
  %337 = vmatmul.mubr.bf16.gmra.mrb[0].mxu0 %v115
  %v338 = vpop.f32.mrb[0].mxu0
  %v339 = vadd.f32 %v242, %v338
  %v340 = vpop.f32.mrb[0].mxu0
  %v341 = vpop.f32.mrb[0].mxu0
  %v342 = vadd.f32 %v245, %v341
  %v343 = vpop.f32.mrb[0].mxu0
  %344 = vdwg.mxu0
  %v345 = vpack.c.bf16 %v111, %v110
  %v346 = vpack.c.bf16 %v113, %v112
  %s347 = scalar_lea.vmem %s1, 128
  %v348 = vld [vmem:[%s347] sm:$0xf]
  %v349 = vld [vmem:[%s347 + $0x4] sm:$0xf]
  %v350 = vld [vmem:[%s347 + $0x8] sm:$0xf]
  %v351 = vld [vmem:[%s347 + $0xc] sm:$0xf]
  %v352 = vld [vmem:[%s347 + $0x10] sm:$0xf]
  %v353 = vld [vmem:[%s347 + $0x14] sm:$0xf]
  %v354 = vld [vmem:[%s347 + $0x18] sm:$0xf]
  %v355 = vld [vmem:[%s347 + $0x1c] sm:$0xf]
  %v356 = vld [vmem:[%s347 + $0x20] sm:$0xf]
  %v357 = vld [vmem:[%s347 + $0x24] sm:$0xf]
  %v358 = vld [vmem:[%s347 + $0x28] sm:$0xf]
  %v359 = vld [vmem:[%s347 + $0x2c] sm:$0xf]
  %v360 = vld [vmem:[%s347 + $0x30] sm:$0xf]
  %v361 = vld [vmem:[%s347 + $0x34] sm:$0xf]
  %v362 = vld [vmem:[%s347 + $0x38] sm:$0xf]
  %v363 = vld [vmem:[%s347 + $0x3c] sm:$0xf]
  %v380 = vunpack.c.l.b16 %v348
  %v381 = vunpack.c.l.b16 %v349
  %v382 = vunpack.c.l.b16 %v350
  %v383 = vunpack.c.l.b16 %v351
  %v384 = vunpack.c.l.b16 %v352
  %v385 = vunpack.c.l.b16 %v353
  %v386 = vunpack.c.l.b16 %v354
  %v387 = vunpack.c.l.b16 %v355
  %v388 = vunpack.c.l.b16 %v356
  %v389 = vunpack.c.l.b16 %v357
  %v390 = vunpack.c.l.b16 %v358
  %v391 = vunpack.c.l.b16 %v359
  %v392 = vunpack.c.l.b16 %v360
  %v393 = vunpack.c.l.b16 %v361
  %v394 = vunpack.c.l.b16 %v362
  %v395 = vunpack.c.l.b16 %v363
  %v396 = vpack.c.b16 %v381, %v380
  %v397 = vpack.c.b16 %v383, %v382
  %v398 = vpack.c.b16 %v385, %v384
  %v399 = vpack.c.b16 %v387, %v386
  %v400 = vpack.c.b16 %v389, %v388
  %v401 = vpack.c.b16 %v391, %v390
  %v402 = vpack.c.b16 %v393, %v392
  %v403 = vpack.c.b16 %v395, %v394
  %412 = vmatprep.subr.bf16.mxu0 0
  %413 = vmatpush1.bf16.msra.mxu0 %v396
  %414 = vmatprep.subr.bf16.mxu0 0
  %415 = vmatpush1.bf16.msra.mxu0 %v397
  %416 = vmatprep.subr.bf16.mxu0 0
  %417 = vmatpush1.bf16.msra.mxu0 %v398
  %418 = vmatprep.subr.bf16.mxu0 0
  %419 = vmatpush1.bf16.msra.mxu0 %v399
  %420 = vmatprep.subr.bf16.mxu0 0
  %421 = vmatpush1.bf16.msra.mxu0 %v400
  %422 = vmatprep.subr.bf16.mxu0 0
  %423 = vmatpush1.bf16.msra.mxu0 %v401
  %424 = vmatprep.subr.bf16.mxu0 0
  %425 = vmatpush1.bf16.msra.mxu0 %v402
  %426 = vmatprep.subr.bf16.mxu0 0
  %427 = vmatpush1.bf16.msra.mxu0 %v403
  %428 = vmatprep.subr.bf16.mxu0 0
  %429 = vmatpush1.bf16.msra.mxu0 0
  %430 = vmatprep.subr.bf16.mxu0 0
  %431 = vmatpush1.bf16.msra.mxu0 0
  %432 = vmatprep.subr.bf16.mxu0 0
  %433 = vmatpush1.bf16.msra.mxu0 0
  %434 = vmatprep.subr.bf16.mxu0 0
  %435 = vmatpush1.bf16.msra.mxu0 0
  %436 = vmatprep.subr.bf16.mxu0 0
  %437 = vmatpush1.bf16.msra.mxu0 0
  %438 = vmatprep.subr.bf16.mxu0 0
  %439 = vmatpush1.bf16.msra.mxu0 0
  %440 = vmatprep.subr.bf16.mxu0 0
  %441 = vmatpush1.bf16.msra.mxu0 0
  %442 = vmatprep.subr.bf16.mxu0 0
  %443 = vmatpush1.bf16.msra.mxu0 0
  %444 = vmatprep.mubr.bf16.mxu0 0
  %445 = vmatmul.mubr.bf16.gmra.mrb[0].mxu0 %v345
  %v446 = vpop.f32.mrb[0].mxu0
  %v447 = vadd.f32 0.0, %v446
  %v448 = vpop.f32.mrb[0].mxu0
  %v449 = vpop.f32.mrb[0].mxu0
  %v450 = vadd.f32 0.0, %v449
  %v451 = vpop.f32.mrb[0].mxu0
  %452 = vmatprep.mubr.bf16.mxu0 0
  %453 = vmatmul.mubr.bf16.gmra.mrb[0].mxu0 %v346
  %v454 = vpop.f32.mrb[0].mxu0
  %v455 = vadd.f32 0.0, %v454
  %v456 = vpop.f32.mrb[0].mxu0
  %v457 = vpop.f32.mrb[0].mxu0
  %v458 = vadd.f32 0.0, %v457
  %v459 = vpop.f32.mrb[0].mxu0
  %460 = vdwg.mxu0
  %v461 = vadd.f32 %v331, %v447
  %v462 = vadd.f32 %v334, %v450
  %v463 = vadd.f32 %v339, %v455
  %v464 = vadd.f32 %v342, %v458
  %v465 = vld [vmem:[%s2] sm:$0x1]
  %v467 = vlaneseq
  %v468 = vshrl.u32 %v467, 7
  %v469 = vsub.s32 0, %v468
  %v470 = vrot.slane %v465, %v469
  %v472 = vadd.f32 %v461, %v470
  %v473 = vadd.f32 %v462, %v470
  %v474 = vadd.f32 %v463, %v470
  %v475 = vadd.f32 %v464, %v470
  %v476 = vmax.f32 %v472, 0.0
  %v477 = vmax.f32 %v473, 0.0
  %v478 = vmax.f32 %v474, 0.0
  %v479 = vmax.f32 %v475, 0.0
  %480 = vst [vmem:[%s5] sm:$0xff] %v476
  %481 = vst [vmem:[%s5 + $0x8] sm:$0xff] %v477
  %482 = vst [vmem:[%s5 + $0x10] sm:$0xff] %v478
  %483 = vst [vmem:[%s5 + $0x18] sm:$0xff] %v479
  %v484 = vrot.slane %v476, 7
  %v485 = vrot.slane %v477, 7
  %v486 = vrot.slane %v478, 7
  %v487 = vrot.slane %v479, 7
  %v488 = vsel %vm88, %v486, %v487
  %v489 = vsel %vm88, %v485, %v486
  %v490 = vsel %vm88, %v484, %v485
  %v491 = vsel %vm88, %v487, %v484
  %v492 = vsel %vm80, 0.0, %v491
  %v493 = vsel %vm81, 0.0, %v490
  %v494 = vsel %vm82, 0.0, %v489
  %v495 = vsel %vm83, 0.0, %v488
  %v496 = vrot.slane %v476, 1
  %v497 = vrot.slane %v477, 1
  %v498 = vrot.slane %v478, 1
  %v499 = vrot.slane %v479, 1
  %v500 = vsel %vm105, %v498, %v499
  %v501 = vsel %vm105, %v497, %v498
  %v502 = vsel %vm105, %v496, %v497
  %v503 = vsel %vm105, %v499, %v496
  %v504 = vsel %vm97, 0.0, %v502
  %v505 = vsel %vm98, 0.0, %v501
  %v506 = vsel %vm99, 0.0, %v500
  %v507 = vsel %vm100, 0.0, %v503
  %v508 = vpack.c.bf16 %v493, %v492
  %v509 = vpack.c.bf16 %v495, %v494
  %v510 = vld [vmem:[%s3] sm:$0xff]
  %v511 = vld [vmem:[%s3 + $0x8] sm:$0xff]
  %v512 = vld [vmem:[%s3 + $0x10] sm:$0xff]
  %v513 = vld [vmem:[%s3 + $0x18] sm:$0xff]
  %v514 = vld [vmem:[%s3 + $0x20] sm:$0xff]
  %v515 = vld [vmem:[%s3 + $0x28] sm:$0xff]
  %v516 = vld [vmem:[%s3 + $0x30] sm:$0xff]
  %v517 = vld [vmem:[%s3 + $0x38] sm:$0xff]
  %v518 = vld [vmem:[%s3 + $0x40] sm:$0xff]
  %v519 = vld [vmem:[%s3 + $0x48] sm:$0xff]
  %v520 = vld [vmem:[%s3 + $0x50] sm:$0xff]
  %v521 = vld [vmem:[%s3 + $0x58] sm:$0xff]
  %v522 = vld [vmem:[%s3 + $0x60] sm:$0xff]
  %v523 = vld [vmem:[%s3 + $0x68] sm:$0xff]
  %v524 = vld [vmem:[%s3 + $0x70] sm:$0xff]
  %v525 = vld [vmem:[%s3 + $0x78] sm:$0xff]
  %v526 = vpack.c.bf16 %v477, %v476
  %v527 = vpack.c.bf16 %v479, %v478
  %s528 = scalar_lea.vmem %s3, 128
  %v529 = vld [vmem:[%s528] sm:$0xff]
  %v530 = vld [vmem:[%s528 + $0x8] sm:$0xff]
  %v531 = vld [vmem:[%s528 + $0x10] sm:$0xff]
  %v532 = vld [vmem:[%s528 + $0x18] sm:$0xff]
  %v533 = vld [vmem:[%s528 + $0x20] sm:$0xff]
  %v534 = vld [vmem:[%s528 + $0x28] sm:$0xff]
  %v535 = vld [vmem:[%s528 + $0x30] sm:$0xff]
  %v536 = vld [vmem:[%s528 + $0x38] sm:$0xff]
  %v537 = vld [vmem:[%s528 + $0x40] sm:$0xff]
  %v538 = vld [vmem:[%s528 + $0x48] sm:$0xff]
  %v539 = vld [vmem:[%s528 + $0x50] sm:$0xff]
  %v540 = vld [vmem:[%s528 + $0x58] sm:$0xff]
  %v541 = vld [vmem:[%s528 + $0x60] sm:$0xff]
  %v542 = vld [vmem:[%s528 + $0x68] sm:$0xff]
  %v543 = vld [vmem:[%s528 + $0x70] sm:$0xff]
  %v544 = vld [vmem:[%s528 + $0x78] sm:$0xff]
  %v561 = vunpack.c.l.b16 %v529
  %v562 = vunpack.c.h.b16 %v529
  %v563 = vunpack.c.l.b16 %v530
  %v564 = vunpack.c.h.b16 %v530
  %v565 = vunpack.c.l.b16 %v531
  %v566 = vunpack.c.h.b16 %v531
  %v567 = vunpack.c.l.b16 %v532
  %v568 = vunpack.c.h.b16 %v532
  %v569 = vunpack.c.l.b16 %v533
  %v570 = vunpack.c.h.b16 %v533
  %v571 = vunpack.c.l.b16 %v534
  %v572 = vunpack.c.h.b16 %v534
  %v573 = vunpack.c.l.b16 %v535
  %v574 = vunpack.c.h.b16 %v535
  %v575 = vunpack.c.l.b16 %v536
  %v576 = vunpack.c.h.b16 %v536
  %v577 = vunpack.c.l.b16 %v537
  %v578 = vunpack.c.h.b16 %v537
  %v579 = vunpack.c.l.b16 %v538
  %v580 = vunpack.c.h.b16 %v538
  %v581 = vunpack.c.l.b16 %v539
  %v582 = vunpack.c.h.b16 %v539
  %v583 = vunpack.c.l.b16 %v540
  %v584 = vunpack.c.h.b16 %v540
  %v585 = vunpack.c.l.b16 %v541
  %v586 = vunpack.c.h.b16 %v541
  %v587 = vunpack.c.l.b16 %v542
  %v588 = vunpack.c.h.b16 %v542
  %v589 = vunpack.c.l.b16 %v543
  %v590 = vunpack.c.h.b16 %v543
  %v591 = vunpack.c.l.b16 %v544
  %v592 = vunpack.c.h.b16 %v544
  %v593 = vpack.c.b16 %v563, %v561
  %v594 = vpack.c.b16 %v564, %v562
  %v595 = vpack.c.b16 %v567, %v565
  %v596 = vpack.c.b16 %v568, %v566
  %v597 = vpack.c.b16 %v571, %v569
  %v598 = vpack.c.b16 %v572, %v570
  %v599 = vpack.c.b16 %v575, %v573
  %v600 = vpack.c.b16 %v576, %v574
  %v601 = vpack.c.b16 %v579, %v577
  %v602 = vpack.c.b16 %v580, %v578
  %v603 = vpack.c.b16 %v583, %v581
  %v604 = vpack.c.b16 %v584, %v582
  %v605 = vpack.c.b16 %v587, %v585
  %v606 = vpack.c.b16 %v588, %v586
  %v607 = vpack.c.b16 %v591, %v589
  %v608 = vpack.c.b16 %v592, %v590
  %625 = vmatprep.subr.bf16.mxu0 %v594
  %626 = vmatpush1.bf16.msra.mxu0 %v593
  %627 = vmatprep.subr.bf16.mxu0 %v596
  %628 = vmatpush1.bf16.msra.mxu0 %v595
  %629 = vmatprep.subr.bf16.mxu0 %v598
  %630 = vmatpush1.bf16.msra.mxu0 %v597
  %631 = vmatprep.subr.bf16.mxu0 %v600
  %632 = vmatpush1.bf16.msra.mxu0 %v599
  %633 = vmatprep.subr.bf16.mxu0 %v602
  %634 = vmatpush1.bf16.msra.mxu0 %v601
  %635 = vmatprep.subr.bf16.mxu0 %v604
  %636 = vmatpush1.bf16.msra.mxu0 %v603
  %637 = vmatprep.subr.bf16.mxu0 %v606
  %638 = vmatpush1.bf16.msra.mxu0 %v605
  %639 = vmatprep.subr.bf16.mxu0 %v608
  %640 = vmatpush1.bf16.msra.mxu0 %v607
  %641 = vmatprep.subr.bf16.mxu0 0
  %642 = vmatpush1.bf16.msra.mxu0 0
  %643 = vmatprep.subr.bf16.mxu0 0
  %644 = vmatpush1.bf16.msra.mxu0 0
  %645 = vmatprep.subr.bf16.mxu0 0
  %646 = vmatpush1.bf16.msra.mxu0 0
  %647 = vmatprep.subr.bf16.mxu0 0
  %648 = vmatpush1.bf16.msra.mxu0 0
  %649 = vmatprep.subr.bf16.mxu0 0
  %650 = vmatpush1.bf16.msra.mxu0 0
  %651 = vmatprep.subr.bf16.mxu0 0
  %652 = vmatpush1.bf16.msra.mxu0 0
  %653 = vmatprep.subr.bf16.mxu0 0
  %654 = vmatpush1.bf16.msra.mxu0 0
  %655 = vmatprep.subr.bf16.mxu0 0
  %656 = vmatpush1.bf16.msra.mxu0 0
  %657 = vmatprep.mubr.bf16.mxu0 0
  %658 = vmatmul.mubr.bf16.gmra.mrb[0].mxu0 %v526
  %v659 = vpop.f32.mrb[0].mxu0
  %v660 = vadd.f32 0.0, %v659
  %v661 = vpop.f32.mrb[0].mxu0
  %v662 = vadd.f32 0.0, %v661
  %v663 = vpop.f32.mrb[0].mxu0
  %v664 = vadd.f32 0.0, %v663
  %v665 = vpop.f32.mrb[0].mxu0
  %v666 = vadd.f32 0.0, %v665
  %667 = vmatprep.mubr.bf16.mxu0 0
  %668 = vmatmul.mubr.bf16.gmra.mrb[0].mxu0 %v527
  %v669 = vpop.f32.mrb[0].mxu0
  %v670 = vadd.f32 0.0, %v669
  %v671 = vpop.f32.mrb[0].mxu0
  %v672 = vadd.f32 0.0, %v671
  %v673 = vpop.f32.mrb[0].mxu0
  %v674 = vadd.f32 0.0, %v673
  %v675 = vpop.f32.mrb[0].mxu0
  %v676 = vadd.f32 0.0, %v675
  %677 = vdwg.mxu0
  %v694 = vunpack.c.l.b16 %v510
  %v695 = vunpack.c.h.b16 %v510
  %v696 = vunpack.c.l.b16 %v511
  %v697 = vunpack.c.h.b16 %v511
  %v698 = vunpack.c.l.b16 %v512
  %v699 = vunpack.c.h.b16 %v512
  %v700 = vunpack.c.l.b16 %v513
  %v701 = vunpack.c.h.b16 %v513
  %v702 = vunpack.c.l.b16 %v514
  %v703 = vunpack.c.h.b16 %v514
  %v704 = vunpack.c.l.b16 %v515
  %v705 = vunpack.c.h.b16 %v515
  %v706 = vunpack.c.l.b16 %v516
  %v707 = vunpack.c.h.b16 %v516
  %v708 = vunpack.c.l.b16 %v517
  %v709 = vunpack.c.h.b16 %v517
  %v710 = vunpack.c.l.b16 %v518
  %v711 = vunpack.c.h.b16 %v518
  %v712 = vunpack.c.l.b16 %v519
  %v713 = vunpack.c.h.b16 %v519
  %v714 = vunpack.c.l.b16 %v520
  %v715 = vunpack.c.h.b16 %v520
  %v716 = vunpack.c.l.b16 %v521
  %v717 = vunpack.c.h.b16 %v521
  %v718 = vunpack.c.l.b16 %v522
  %v719 = vunpack.c.h.b16 %v522
  %v720 = vunpack.c.l.b16 %v523
  %v721 = vunpack.c.h.b16 %v523
  %v722 = vunpack.c.l.b16 %v524
  %v723 = vunpack.c.h.b16 %v524
  %v724 = vunpack.c.l.b16 %v525
  %v725 = vunpack.c.h.b16 %v525
  %v726 = vpack.c.b16 %v696, %v694
  %v727 = vpack.c.b16 %v697, %v695
  %v728 = vpack.c.b16 %v700, %v698
  %v729 = vpack.c.b16 %v701, %v699
  %v730 = vpack.c.b16 %v704, %v702
  %v731 = vpack.c.b16 %v705, %v703
  %v732 = vpack.c.b16 %v708, %v706
  %v733 = vpack.c.b16 %v709, %v707
  %v734 = vpack.c.b16 %v712, %v710
  %v735 = vpack.c.b16 %v713, %v711
  %v736 = vpack.c.b16 %v716, %v714
  %v737 = vpack.c.b16 %v717, %v715
  %v738 = vpack.c.b16 %v720, %v718
  %v739 = vpack.c.b16 %v721, %v719
  %v740 = vpack.c.b16 %v724, %v722
  %v741 = vpack.c.b16 %v725, %v723
  %758 = vmatprep.subr.bf16.mxu0 %v727
  %759 = vmatpush1.bf16.msra.mxu0 %v726
  %760 = vmatprep.subr.bf16.mxu0 %v729
  %761 = vmatpush1.bf16.msra.mxu0 %v728
  %762 = vmatprep.subr.bf16.mxu0 %v731
  %763 = vmatpush1.bf16.msra.mxu0 %v730
  %764 = vmatprep.subr.bf16.mxu0 %v733
  %765 = vmatpush1.bf16.msra.mxu0 %v732
  %766 = vmatprep.subr.bf16.mxu0 %v735
  %767 = vmatpush1.bf16.msra.mxu0 %v734
  %768 = vmatprep.subr.bf16.mxu0 %v737
  %769 = vmatpush1.bf16.msra.mxu0 %v736
  %770 = vmatprep.subr.bf16.mxu0 %v739
  %771 = vmatpush1.bf16.msra.mxu0 %v738
  %772 = vmatprep.subr.bf16.mxu0 %v741
  %773 = vmatpush1.bf16.msra.mxu0 %v740
  %774 = vmatprep.subr.bf16.mxu0 0
  %775 = vmatpush1.bf16.msra.mxu0 0
  %776 = vmatprep.subr.bf16.mxu0 0
  %777 = vmatpush1.bf16.msra.mxu0 0
  %778 = vmatprep.subr.bf16.mxu0 0
  %779 = vmatpush1.bf16.msra.mxu0 0
  %780 = vmatprep.subr.bf16.mxu0 0
  %781 = vmatpush1.bf16.msra.mxu0 0
  %782 = vmatprep.subr.bf16.mxu0 0
  %783 = vmatpush1.bf16.msra.mxu0 0
  %784 = vmatprep.subr.bf16.mxu0 0
  %785 = vmatpush1.bf16.msra.mxu0 0
  %786 = vmatprep.subr.bf16.mxu0 0
  %787 = vmatpush1.bf16.msra.mxu0 0
  %788 = vmatprep.subr.bf16.mxu0 0
  %789 = vmatpush1.bf16.msra.mxu0 0
  %790 = vmatprep.mubr.bf16.mxu0 0
  %791 = vmatmul.mubr.bf16.gmra.mrb[0].mxu0 %v508
  %v792 = vpop.f32.mrb[0].mxu0
  %v793 = vadd.f32 %v660, %v792
  %v794 = vpop.f32.mrb[0].mxu0
  %v795 = vadd.f32 %v662, %v794
  %v796 = vpop.f32.mrb[0].mxu0
  %v797 = vadd.f32 %v664, %v796
  %v798 = vpop.f32.mrb[0].mxu0
  %v799 = vadd.f32 %v666, %v798
  %800 = vmatprep.mubr.bf16.mxu0 0
  %801 = vmatmul.mubr.bf16.gmra.mrb[0].mxu0 %v509
  %v802 = vpop.f32.mrb[0].mxu0
  %v803 = vadd.f32 %v670, %v802
  %v804 = vpop.f32.mrb[0].mxu0
  %v805 = vadd.f32 %v672, %v804
  %v806 = vpop.f32.mrb[0].mxu0
  %v807 = vadd.f32 %v674, %v806
  %v808 = vpop.f32.mrb[0].mxu0
  %v809 = vadd.f32 %v676, %v808
  %810 = vdwg.mxu0
  %v811 = vpack.c.bf16 %v505, %v504
  %v812 = vpack.c.bf16 %v507, %v506
  %s813 = scalar_lea.vmem %s3, 256
  %v814 = vld [vmem:[%s813] sm:$0xff]
  %v815 = vld [vmem:[%s813 + $0x8] sm:$0xff]
  %v816 = vld [vmem:[%s813 + $0x10] sm:$0xff]
  %v817 = vld [vmem:[%s813 + $0x18] sm:$0xff]
  %v818 = vld [vmem:[%s813 + $0x20] sm:$0xff]
  %v819 = vld [vmem:[%s813 + $0x28] sm:$0xff]
  %v820 = vld [vmem:[%s813 + $0x30] sm:$0xff]
  %v821 = vld [vmem:[%s813 + $0x38] sm:$0xff]
  %v822 = vld [vmem:[%s813 + $0x40] sm:$0xff]
  %v823 = vld [vmem:[%s813 + $0x48] sm:$0xff]
  %v824 = vld [vmem:[%s813 + $0x50] sm:$0xff]
  %v825 = vld [vmem:[%s813 + $0x58] sm:$0xff]
  %v826 = vld [vmem:[%s813 + $0x60] sm:$0xff]
  %v827 = vld [vmem:[%s813 + $0x68] sm:$0xff]
  %v828 = vld [vmem:[%s813 + $0x70] sm:$0xff]
  %v829 = vld [vmem:[%s813 + $0x78] sm:$0xff]
  %v846 = vunpack.c.l.b16 %v814
  %v847 = vunpack.c.h.b16 %v814
  %v848 = vunpack.c.l.b16 %v815
  %v849 = vunpack.c.h.b16 %v815
  %v850 = vunpack.c.l.b16 %v816
  %v851 = vunpack.c.h.b16 %v816
  %v852 = vunpack.c.l.b16 %v817
  %v853 = vunpack.c.h.b16 %v817
  %v854 = vunpack.c.l.b16 %v818
  %v855 = vunpack.c.h.b16 %v818
  %v856 = vunpack.c.l.b16 %v819
  %v857 = vunpack.c.h.b16 %v819
  %v858 = vunpack.c.l.b16 %v820
  %v859 = vunpack.c.h.b16 %v820
  %v860 = vunpack.c.l.b16 %v821
  %v861 = vunpack.c.h.b16 %v821
  %v862 = vunpack.c.l.b16 %v822
  %v863 = vunpack.c.h.b16 %v822
  %v864 = vunpack.c.l.b16 %v823
  %v865 = vunpack.c.h.b16 %v823
  %v866 = vunpack.c.l.b16 %v824
  %v867 = vunpack.c.h.b16 %v824
  %v868 = vunpack.c.l.b16 %v825
  %v869 = vunpack.c.h.b16 %v825
  %v870 = vunpack.c.l.b16 %v826
  %v871 = vunpack.c.h.b16 %v826
  %v872 = vunpack.c.l.b16 %v827
  %v873 = vunpack.c.h.b16 %v827
  %v874 = vunpack.c.l.b16 %v828
  %v875 = vunpack.c.h.b16 %v828
  %v876 = vunpack.c.l.b16 %v829
  %v877 = vunpack.c.h.b16 %v829
  %v878 = vpack.c.b16 %v848, %v846
  %v879 = vpack.c.b16 %v849, %v847
  %v880 = vpack.c.b16 %v852, %v850
  %v881 = vpack.c.b16 %v853, %v851
  %v882 = vpack.c.b16 %v856, %v854
  %v883 = vpack.c.b16 %v857, %v855
  %v884 = vpack.c.b16 %v860, %v858
  %v885 = vpack.c.b16 %v861, %v859
  %v886 = vpack.c.b16 %v864, %v862
  %v887 = vpack.c.b16 %v865, %v863
  %v888 = vpack.c.b16 %v868, %v866
  %v889 = vpack.c.b16 %v869, %v867
  %v890 = vpack.c.b16 %v872, %v870
  %v891 = vpack.c.b16 %v873, %v871
  %v892 = vpack.c.b16 %v876, %v874
  %v893 = vpack.c.b16 %v877, %v875
  %910 = vmatprep.subr.bf16.mxu0 %v879
  %911 = vmatpush1.bf16.msra.mxu0 %v878
  %912 = vmatprep.subr.bf16.mxu0 %v881
  %913 = vmatpush1.bf16.msra.mxu0 %v880
  %914 = vmatprep.subr.bf16.mxu0 %v883
  %915 = vmatpush1.bf16.msra.mxu0 %v882
  %916 = vmatprep.subr.bf16.mxu0 %v885
  %917 = vmatpush1.bf16.msra.mxu0 %v884
  %918 = vmatprep.subr.bf16.mxu0 %v887
  %919 = vmatpush1.bf16.msra.mxu0 %v886
  %920 = vmatprep.subr.bf16.mxu0 %v889
  %921 = vmatpush1.bf16.msra.mxu0 %v888
  %922 = vmatprep.subr.bf16.mxu0 %v891
  %923 = vmatpush1.bf16.msra.mxu0 %v890
  %924 = vmatprep.subr.bf16.mxu0 %v893
  %925 = vmatpush1.bf16.msra.mxu0 %v892
  %926 = vmatprep.subr.bf16.mxu0 0
  %927 = vmatpush1.bf16.msra.mxu0 0
  %928 = vmatprep.subr.bf16.mxu0 0
  %929 = vmatpush1.bf16.msra.mxu0 0
  %930 = vmatprep.subr.bf16.mxu0 0
  %931 = vmatpush1.bf16.msra.mxu0 0
  %932 = vmatprep.subr.bf16.mxu0 0
  %933 = vmatpush1.bf16.msra.mxu0 0
  %934 = vmatprep.subr.bf16.mxu0 0
  %935 = vmatpush1.bf16.msra.mxu0 0
  %936 = vmatprep.subr.bf16.mxu0 0
  %937 = vmatpush1.bf16.msra.mxu0 0
  %938 = vmatprep.subr.bf16.mxu0 0
  %939 = vmatpush1.bf16.msra.mxu0 0
  %940 = vmatprep.subr.bf16.mxu0 0
  %941 = vmatpush1.bf16.msra.mxu0 0
  %942 = vmatprep.mubr.bf16.mxu0 0
  %943 = vmatmul.mubr.bf16.gmra.mrb[0].mxu0 %v811
  %v944 = vpop.f32.mrb[0].mxu0
  %v945 = vadd.f32 0.0, %v944
  %v946 = vpop.f32.mrb[0].mxu0
  %v947 = vadd.f32 0.0, %v946
  %v948 = vpop.f32.mrb[0].mxu0
  %v949 = vadd.f32 0.0, %v948
  %v950 = vpop.f32.mrb[0].mxu0
  %v951 = vadd.f32 0.0, %v950
  %952 = vmatprep.mubr.bf16.mxu0 0
  %953 = vmatmul.mubr.bf16.gmra.mrb[0].mxu0 %v812
  %v954 = vpop.f32.mrb[0].mxu0
  %v955 = vadd.f32 0.0, %v954
  %v956 = vpop.f32.mrb[0].mxu0
  %v957 = vadd.f32 0.0, %v956
  %v958 = vpop.f32.mrb[0].mxu0
  %v959 = vadd.f32 0.0, %v958
  %v960 = vpop.f32.mrb[0].mxu0
  %v961 = vadd.f32 0.0, %v960
  %962 = vdwg.mxu0
  %v963 = vadd.f32 %v793, %v945
  %v964 = vadd.f32 %v795, %v947
  %v965 = vadd.f32 %v797, %v949
  %v966 = vadd.f32 %v799, %v951
  %v967 = vadd.f32 %v803, %v955
  %v968 = vadd.f32 %v805, %v957
  %v969 = vadd.f32 %v807, %v959
  %v970 = vadd.f32 %v809, %v961
  %v971 = vld [vmem:[%s4] sm:$0x3]
  %v973 = vlaneseq
  %v974 = vshrl.u32 %v973, 7
  %v975 = vsub.s32 0, %v974
  %v976 = vrot.slane %v971, %v975
  %v977 = vlaneseq
  %v978 = vshrl.u32 %v977, 7
  %v979 = vsub.s32 1, %v978
  %v980 = vrot.slane %v971, %v979
  %v983 = vadd.f32 %v963, %v976
  %v984 = vadd.f32 %v964, %v980
  %v985 = vadd.f32 %v965, %v976
  %v986 = vadd.f32 %v966, %v980
  %v987 = vadd.f32 %v967, %v976
  %v988 = vadd.f32 %v968, %v980
  %v989 = vadd.f32 %v969, %v976
  %v990 = vadd.f32 %v970, %v980
  %v991 = vmax.f32 %v983, 0.0
  %v992 = vmax.f32 %v984, 0.0
  %v993 = vmax.f32 %v985, 0.0
  %v994 = vmax.f32 %v986, 0.0
  %v995 = vmax.f32 %v987, 0.0
  %v996 = vmax.f32 %v988, 0.0
  %v997 = vmax.f32 %v989, 0.0
  %v998 = vmax.f32 %v990, 0.0
  %999 = vst [vmem:[%s6] sm:$0xff] %v991
  %1000 = vst [vmem:[%s6 + $0x8] sm:$0xff] %v992
  %1001 = vst [vmem:[%s6 + $0x10] sm:$0xff] %v993
  %1002 = vst [vmem:[%s6 + $0x18] sm:$0xff] %v994
  %1003 = vst [vmem:[%s6 + $0x20] sm:$0xff] %v995
  %1004 = vst [vmem:[%s6 + $0x28] sm:$0xff] %v996
  %1005 = vst [vmem:[%s6 + $0x30] sm:$0xff] %v997
  %1006 = vst [vmem:[%s6 + $0x38] sm:$0xff] %v998
  // Predicated region
  $region22: #{fused_feature_extractor.1} parent=0 // pred_check
    _
  $region23: #{fused_feature_extractor.1} parent=0 // pred_check_branch
    %1008 = sbr.rel (0) target = $region25
  $region24: #{fused_feature_extractor.1} parent=0 // pred_region
    _
  $region25: #{fused_feature_extractor.1} parent=0 // pred_fallthru
    _
  // Predicated region
  $region26: #{fused_feature_extractor.1} parent=0 // pred_check
    _
  $region27: #{fused_feature_extractor.1} parent=0 // pred_check_branch
    %1010 = sbr.rel (0) target = $region29
  $region28: #{fused_feature_extractor.1} parent=0 // pred_region
    _
  $region29: #{fused_feature_extractor.1} parent=0 // pred_fallthru
    _
  // Predicated region
  $region30: #{fused_feature_extractor.1} parent=0 // pred_check
    _
  $region31: #{fused_feature_extractor.1} parent=0 // pred_check_branch
    %1012 = sbr.rel (0) target = $region33
  $region32: #{fused_feature_extractor.1} parent=0 // pred_region
    _
  $region33: #{fused_feature_extractor.1} parent=0 // pred_fallthru
    _
  // Predicated region
  $region34: #{fused_feature_extractor.1} parent=0 // pred_check
    _
  $region35: #{fused_feature_extractor.1} parent=0 // pred_check_branch
    %1014 = sbr.rel (0) target = $region37
  $region36: #{fused_feature_extractor.1} parent=0 // pred_region
    _
  $region37: #{fused_feature_extractor.1} parent=0 // pred_fallthru
    _

</llo_original>
